<compile_context>
chip_gen: v7x
topology: tpu7x:2x2x1
jax: 0.10.0
libtpu: 0.0.40
codegen_flags: <defaults>
</compile_context>

<pallas_src>
import jax
import jax.numpy as jnp
from jax.experimental import pallas as pl
from jax.experimental.pallas import tpu as pltpu


def _round_up(x, m):
    return ((x + m - 1) // m) * m


def _ceil_div(a, b):
    return -(-a // b)


def _plan_dim(dim, tile, align):
    """Choose (padded_extent, tile) with tile a multiple of `align` and
    padding waste bounded to < one tile (no pathological round-ups)."""
    padded = _round_up(dim, align)
    tile = max(align, _round_up(tile, align))
    if tile >= padded:
        return padded, padded
    n_blocks = _ceil_div(padded, tile)
    t = _round_up(_ceil_div(padded, n_blocks), align)
    return _round_up(padded, t), t


def _vmem_limit_bytes(vmem_est):
    """Generation-aware VMEM cap: ~75% of physical VMEM (≈96 MiB on v5e/v6e,
    ≈48 MiB on v7x), but never below what the tiles actually need."""
    try:
        info = pltpu.get_tpu_info()
        cap = int(getattr(info, "vmem_capacity_bytes", 0)) or (64 << 20)
    except Exception:
        cap = 64 << 20
    return int(min(max(2 * vmem_est, 16 << 20), int(cap * 0.75)))


def _linear_kernel(x_ref, w_ref, b_ref, o_ref):
    # x_ref: (tm, tk)   w_ref: (tk, tn) pre-transposed weights
    # b_ref: (1, tn) f32   o_ref: (tm, tn) f32
    # o_ref's block index is k-invariant, so it stays resident in VMEM across
    # the K grid axis and doubles as the f32 accumulator (no scratch needed).
    k = pl.program_id(2)

    @pl.when(k == 0)
    def _init():
        # Fold bias into the accumulator init; no finalize add/copy needed.
        o_ref[...] = jnp.broadcast_to(b_ref[...], o_ref.shape)

    o_ref[...] += jnp.dot(
        x_ref[...], w_ref[...], preferred_element_type=jnp.float32
    )


def _padded_linear(x_p, w_p, b_p, tm_e, tn_e, tk_e):
    """Pallas matmul+bias on pre-padded operands. Returns padded f32 output."""
    Mp, Kp = x_p.shape
    Kp2, Np = w_p.shape
    assert Kp == Kp2 and b_p.shape == (1, Np)
    assert Mp % tm_e == 0 and Np % tn_e == 0 and Kp % tk_e == 0

    grid = (Mp // tm_e, Np // tn_e, Kp // tk_e)
    in_bytes = jnp.dtype(x_p.dtype).itemsize

    vmem_est = (
        2 * (tm_e * tk_e + tk_e * tn_e) * in_bytes   # double-buffered inputs
        + 2 * tm_e * tn_e * 4                        # double-buffered f32 output
        + 2 * tn_e * 4                               # bias tile
    )

    cost = pl.CostEstimate(
        flops=2 * Mp * Np * Kp,
        transcendentals=0,
        bytes_accessed=(Mp * Kp + Kp * Np) * in_bytes + Mp * Np * 4,
    )

    return pl.pallas_call(
        _linear_kernel,
        out_shape=jax.ShapeDtypeStruct((Mp, Np), jnp.float32),
        grid_spec=pltpu.PrefetchScalarGridSpec(
            num_scalar_prefetch=0,
            grid=grid,
            in_specs=[
                pl.BlockSpec((tm_e, tk_e), lambda i, j, k: (i, k)),
                pl.BlockSpec((tk_e, tn_e), lambda i, j, k: (k, j)),
                pl.BlockSpec((1, tn_e), lambda i, j, k: (0, j)),
            ],
            out_specs=pl.BlockSpec((tm_e, tn_e), lambda i, j, k: (i, j)),
        ),
        compiler_params=pltpu.CompilerParams(
            dimension_semantics=("parallel", "parallel", "arbitrary"),
            vmem_limit_bytes=_vmem_limit_bytes(vmem_est),
        ),
        cost_estimate=cost,
    )(x_p, w_p, b_p)


def _prep_weights(weights_t, bias, tn, tk, op_dtype):
    """Cast + pad weights_t (K, N) and bias once. Returns padded operands and
    the N/K tile sizes implied by the padding."""
    K, N = weights_t.shape
    Kp, tk_e = _plan_dim(K, tk, 128)
    Np, tn_e = _plan_dim(N, tn, 128)
    w_p = weights_t.astype(op_dtype)
    if (Kp, Np) != (K, N):
        w_p = jnp.pad(w_p, ((0, Kp - K), (0, Np - N)))
    b_p = bias.reshape(1, N).astype(jnp.float32)
    if Np != N:
        b_p = jnp.pad(b_p, ((0, 0), (0, Np - N)))
    return w_p, b_p, tn_e, tk_e


def _run(x, w_p, b_p, n_out, *, tm, tn_e, tk_e, op_dtype):
    """Per-call path: cast/pad x only, run the kernel, slice the result."""
    M, K = x.shape
    Kp, Np = w_p.shape
    # bf16 packs 16 rows per sublane group; align M tiles accordingly.
    sub = 16 if jnp.dtype(op_dtype).itemsize == 2 else 8
    Mp, tm_e = _plan_dim(M, tm, sub)

    # v7x has 2 TensorCores sharded over the 'parallel' grid axes: ensure at
    # least 2 (i, j) blocks whenever the problem is splittable.
    if (Mp // tm_e) * (Np // tn_e) == 1:
        if tn_e % 256 == 0:
            tn_e //= 2
        elif tm_e % (2 * sub) == 0:
            tm_e //= 2

    if x.dtype != op_dtype:
        x = x.astype(op_dtype)
    if (Mp, Kp) != (M, K):
        x = jnp.pad(x, ((0, Mp - M), (0, Kp - K)))

    out = _padded_linear(x, w_p, b_p, tm_e, tn_e, tk_e)
    if (Mp, Np) != (M, n_out):
        out = out[:M, :n_out]
    return out


def confidence_linear_forward(x, weights_t, bias, *, tm=512, tn=512, tk=1024,
                              compute_dtype=None):
    """y = x @ weights_t + bias, with weights_t = weights.T of shape (K, N).

    Convenience path that pads/casts the weights per call; for repeated use
    prefer ConfidenceLinearLayerJAX, which hoists the weight prep to __init__."""
    K, N = weights_t.shape
    assert x.shape[1] == K, (x.shape, weights_t.shape)
    assert bias.shape == (N,)
    op_dtype = compute_dtype if compute_dtype is not None else x.dtype
    w_p, b_p, tn_e, tk_e = _prep_weights(weights_t, bias, tn, tk, op_dtype)
    return _run(x, w_p, b_p, N, tm=tm, tn_e=tn_e, tk_e=tk_e, op_dtype=op_dtype)


class ConfidenceLinearLayerJAX:
    """JAX/Pallas port of ConfidenceLinearLayer. Forward only; the
    confidence/frequency buffers are initialized like the PyTorch module but
    unused in forward."""

    def __init__(self, input_dim, output_dim, alpha=0.9, beta=0.1, gamma=0.1,
                 delta=1.0, key=None, compute_dtype=jnp.bfloat16,
                 tm=512, tn=512, tk=1024):
        self.alpha, self.beta, self.gamma, self.delta = alpha, beta, gamma, delta
        if key is None:
            key = jax.random.PRNGKey(0)
        # torch.randn(output_dim, input_dim) -> standard normal (deterministic here).
        self.weights = jax.random.normal(key, (output_dim, input_dim),
                                         dtype=jnp.float32)
        self.bias = jnp.zeros((output_dim,), dtype=jnp.float32)
        self.confidence = jnp.ones((output_dim, input_dim), jnp.float32) * 0.5
        self.frequency = jnp.zeros((output_dim, input_dim), jnp.float32)
        self.moving_average = jnp.zeros_like(self.confidence)

        self._op_dtype = compute_dtype if compute_dtype is not None else jnp.float32
        self._tm = tm
        self._out_dim = output_dim
        # Hoisted weight prep: transpose + cast + pad ONCE, not per call.
        # (self.weights is kept as the "parameter" for parity with the PyTorch
        # module / custom_backward; only self._w_p is read by the kernel.)
        self._w_p, self._b_p, self._tn_e, self._tk_e = _prep_weights(
            self.weights.T, self.bias, tn, tk, self._op_dtype)
        # TODO(synk): custom_backward / update_frequency_and_confidence are
        # training-time buffer updates, not part of the forward kernel.

    def __call__(self, x):
        return _run(x, self._w_p, self._b_p, self._out_dim,
                    tm=self._tm, tn_e=self._tn_e, tk_e=self._tk_e,
                    op_dtype=self._op_dtype)


if __name__ == "__main__":
    batch, input_dim, output_dim = 8, 32, 16

    key = jax.random.PRNGKey(0)
    k_w, k_x = jax.random.split(key)
    x = jax.random.normal(k_x, (batch, input_dim), dtype=jnp.float32)

    # f32-operand path: tight tolerance against plain-JAX reference.
    layer_f32 = ConfidenceLinearLayerJAX(input_dim, output_dim, key=k_w,
                                         compute_dtype=None)
    y = jax.block_until_ready(layer_f32(x))
    y_ref = x @ layer_f32.weights.T + layer_f32.bias
    assert y.shape == (batch, output_dim)
    assert jnp.allclose(y, y_ref, atol=1e-5, rtol=1e-5), "f32 mismatch vs reference"

    # Default bf16-operand path (f32 accumulation): looser tolerance.
    layer_bf16 = ConfidenceLinearLayerJAX(input_dim, output_dim, key=k_w)
    y_bf16 = jax.block_until_ready(layer_bf16(x))
    assert jnp.allclose(y_bf16, y_ref, atol=0.5, rtol=5e-2), "bf16 mismatch vs reference"

    # Standalone per-call path (pads/casts weights inline).
    y_fn = jax.block_until_ready(
        confidence_linear_forward(x, layer_f32.weights.T, layer_f32.bias))
    assert jnp.allclose(y_fn, y_ref, atol=1e-5, rtol=1e-5), "fn mismatch vs reference"

    print("KERNEL_OK")
</pallas_src>

<mosaic_0001>
module attributes {stable_mosaic.version = 11 : i64} {
  func.func @_linear_kernel(%arg0: i32, %arg1: i32, %arg2: i32, %arg3: memref<8x128xf32, #tpu.memory_space<vmem>>, %arg4: memref<128x128xf32, #tpu.memory_space<vmem>>, %arg5: memref<1x128xf32, #tpu.memory_space<vmem>>, %arg6: memref<8x128xf32, #tpu.memory_space<vmem>>) attributes {dimension_semantics = [#tpu.dimension_semantics<parallel>, #tpu.dimension_semantics<parallel>, #tpu.dimension_semantics<arbitrary>], iteration_bounds = array<i64: 1, 1, 1>, scalar_prefetch = 0 : i64, scratch_operands = 0 : i64, tpu.core_type = #tpu.core_type<tc>, window_params = [{transform_indices = @transform_0, window_bounds = array<i64: 8, 128>}, {transform_indices = @transform_1, window_bounds = array<i64: 128, 128>}, {transform_indices = @transform_2, window_bounds = array<i64: 1, 128>}, {transform_indices = @transform_3, window_bounds = array<i64: 8, 128>}]} {
    %c0_i32 = arith.constant 0 : i32
    %0 = arith.cmpi eq, %arg2, %c0_i32 : i32
    %1 = arith.extui %0 : i1 to i32
    %c0_i32_0 = arith.constant 0 : i32
    %2 = arith.cmpi ne, %1, %c0_i32_0 : i32
    scf.if %2 {
      %c0_8 = arith.constant 0 : index
      %c0_9 = arith.constant 0 : index
      %9 = vector.load %arg5[%c0_8, %c0_9] : memref<1x128xf32, #tpu.memory_space<vmem>>, vector<1x128xf32>
      %10 = vector.shape_cast %9 : vector<1x128xf32> to vector<1x128xf32>
      %11 = vector.broadcast %10 : vector<1x128xf32> to vector<8x128xf32>
      %c0_10 = arith.constant 0 : index
      %c0_11 = arith.constant 0 : index
      %12 = vector.load %arg6[%c0_10, %c0_11] : memref<8x128xf32, #tpu.memory_space<vmem>>, vector<8x128xf32>
      tpu.vector_store %arg6[%c0_10, %c0_11], %11 {strides = array<i32>} : memref<8x128xf32, #tpu.memory_space<vmem>>, vector<8x128xf32>,
    } else {
    }
    %c0 = arith.constant 0 : index
    %c0_1 = arith.constant 0 : index
    %3 = vector.load %arg6[%c0, %c0_1] : memref<8x128xf32, #tpu.memory_space<vmem>>, vector<8x128xf32>
    %c0_2 = arith.constant 0 : index
    %c0_3 = arith.constant 0 : index
    %4 = vector.load %arg3[%c0_2, %c0_3] : memref<8x128xf32, #tpu.memory_space<vmem>>, vector<8x128xf32>
    %c0_4 = arith.constant 0 : index
    %c0_5 = arith.constant 0 : index
    %5 = vector.load %arg4[%c0_4, %c0_5] : memref<128x128xf32, #tpu.memory_space<vmem>>, vector<128x128xf32>
    %cst = arith.constant dense<0.000000e+00> : vector<8x128xf32>
    %6 = tpu.matmul %4, %5, %cst {dimension_numbers = #tpu.dot_dimension_numbers<[1], [0], [0], [1], [0, 0, 1, 1], [], []>} : vector<8x128xf32>, vector<128x128xf32>, vector<8x128xf32> -> vector<8x128xf32>
    %7 = arith.addf %3, %6 : vector<8x128xf32>
    %c0_6 = arith.constant 0 : index
    %c0_7 = arith.constant 0 : index
    %8 = vector.load %arg6[%c0_6, %c0_7] : memref<8x128xf32, #tpu.memory_space<vmem>>, vector<8x128xf32>
    tpu.vector_store %arg6[%c0_6, %c0_7], %7 {strides = array<i32>} : memref<8x128xf32, #tpu.memory_space<vmem>>, vector<8x128xf32>,
    return
  }
  func.func @transform_0(%arg0: i32, %arg1: i32, %arg2: i32) -> (i32, i32) {
    %c0_i32 = arith.constant 0 : i32
    return %arg0, %arg2 : i32, i32
  }
  func.func @transform_1(%arg0: i32, %arg1: i32, %arg2: i32) -> (i32, i32) {
    %c0_i32 = arith.constant 0 : i32
    return %arg2, %arg1 : i32, i32
  }
  func.func @transform_2(%arg0: i32, %arg1: i32, %arg2: i32) -> (i32, i32) {
    %c0_i32 = arith.constant 0 : i32
    %c0_i32_0 = arith.constant 0 : i32
    return %c0_i32, %arg1 : i32, i32
  }
  func.func @transform_3(%arg0: i32, %arg1: i32, %arg2: i32) -> (i32, i32) {
    %c0_i32 = arith.constant 0 : i32
    return %arg0, %arg1 : i32, i32
  }
}

</mosaic_0001>

<llo_original>
// kernel: tpu_custom_call.1
$region0: #{tpu_custom_call.1}
  #allocation0 [shape = 'u32[]', space=smem, size = 0x4, offset = 0x4, fixed_abs, tag = 'smem constant byte address 0x4 - core index']
  #allocation1 [shape = 'u32[144,128]{1,0:T(1,128)}', space=vmem, size = 0x12000, scoped, tag = 'internal scratch']
  %s0 = inlined_call_operand.hbm [shape: f32[8,128], index: 0, kind: input, shape index: {}]
  %s1 = inlined_call_operand.hbm [shape: f32[128,128], index: 1, kind: input, shape index: {}]
  %s2 = inlined_call_operand.vmem [shape: f32[1,128], index: 2, kind: input, shape index: {}]
  %s3 = inlined_call_operand.hbm [shape: f32[8,128], index: 3, kind: output, shape index: {}]
  %s4 = sld [smem:[#allocation0]]
  $region34: #{tpu_custom_call.1} parent=0
    _
  %s6 = ssub.s32 1, %s4
  %s7 = scalar_select 0, %s6, %s4
  $region1: #{tpu_custom_call.1} parent=0
    #allocation2 [shape = 'u8[4096]{0}', space=vmem, size = 0x1000, scoped, tag = 'input window, operand 0, single buffered']
    #allocation3 [shape = 's32[1]{0}', space=sflag, size = 0x4, scoped, tag = 'scoped memory for tpu_custom_call.1']
    #allocation4 [shape = 's32[1]{0}', space=sflag, size = 0x4, scoped, tag = 'scoped memory for tpu_custom_call.1']
    #allocation5 [shape = 'u8[65536]{0}', space=vmem, size = 0x10000, scoped, tag = 'input window, operand 1, single buffered']
    #allocation6 [shape = 's32[1]{0}', space=sflag, size = 0x4, scoped, tag = 'scoped memory for tpu_custom_call.1']
    #allocation7 [shape = 'u8[4096]{0}', space=vmem, size = 0x1000, scoped, tag = 'output window, operand 0, single buffered']
    %8 = vsyncpa [#allocation3], 0
    %9 = vsyncpa [#allocation6], 0
    %10 = vsyncpa [#allocation4], 0
    // Predicated region
    $region2: #{tpu_custom_call.1} parent=1 // pred_check
      _
    $region3: #{tpu_custom_call.1} parent=1 // pred_check_branch
      %12 = sbr.rel (0) target = $region5
    $region4: #{tpu_custom_call.1} parent=1 // pred_region
      %s14 = ssub.s32 128, 128
      %15 = vsyncadd [#allocation3], %s14
      %s17 = sshll.u32 [#allocation2], 4
      %s18 = int_to_ptr.vmem [resolvable:$true] %s17
      %20 = dma.hbm_to_vmem [thread:$0]  %s0, 128, %s18, [#allocation3]
    $region5: #{tpu_custom_call.1} parent=1 // pred_fallthru
      _
    // Predicated region
    $region6: #{tpu_custom_call.1} parent=1 // pred_check
      _
    $region7: #{tpu_custom_call.1} parent=1 // pred_check_branch
      %22 = sbr.rel (0) target = $region9
    $region8: #{tpu_custom_call.1} parent=1 // pred_region
      %s24 = ssub.s32 2048, 2048
      %25 = vsyncadd [#allocation6], %s24
      %s26 = sshll.u32 [#allocation5], 4
      %s27 = int_to_ptr.vmem [resolvable:$true] %s26
      %32 = dma.hbm_to_vmem [thread:$0]  %s1, 2048, %s27, [#allocation6], 128, 128, 8
    $region9: #{tpu_custom_call.1} parent=1 // pred_fallthru
      _
    // Predicated region
    $region10: #{tpu_custom_call.1} parent=1 // pred_check
      _
    $region11: #{tpu_custom_call.1} parent=1 // pred_check_branch
      %34 = sbr.rel (0) target = $region13
    $region12: #{tpu_custom_call.1} parent=1 // pred_region
      _
    $region13: #{tpu_custom_call.1} parent=1 // pred_fallthru
      _
    // Predicated region
    $region14: #{tpu_custom_call.1} parent=1 // pred_check
      _
    $region15: #{tpu_custom_call.1} parent=1 // pred_check_branch
      %36 = sbr.rel (0) target = $region17
    $region16: #{tpu_custom_call.1} parent=1 // pred_region
      %37 = dma.done [#allocation3], 128
    $region17: #{tpu_custom_call.1} parent=1 // pred_fallthru
      _
    // Predicated region
    $region18: #{tpu_custom_call.1} parent=1 // pred_check
      _
    $region19: #{tpu_custom_call.1} parent=1 // pred_check_branch
      %39 = sbr.rel (0) target = $region21
    $region20: #{tpu_custom_call.1} parent=1 // pred_region
      %40 = dma.done [#allocation6], 2048
    $region21: #{tpu_custom_call.1} parent=1 // pred_fallthru
      _
    %p41 = scmp.eq.s32.totalorder 0, 0
    // Predicated region
    $region22: #{tpu_custom_call.1} parent=1 // pred_check
      %p42 = pneg %p41
    $region23: #{tpu_custom_call.1} parent=1 // pred_check_branch
      %44 = sbr.rel (%p42) target = $region25
    $region24: #{tpu_custom_call.1} parent=1 // pred_region
      %v45 = vld [vmem:[%s2] sm:$0x1]
      %v47 = vlaneseq
      %v48 = vshrl.u32 %v47, 7
      %v49 = vsub.s32 0, %v48
      %v50 = vrot.slane %v45, %v49
      %52 = vst [vmem:[#allocation7] sm:$0xff] %v50
    $region25: #{tpu_custom_call.1} parent=1 // pred_fallthru
      _
    %v53 = vld [vmem:[#allocation7] sm:$0xff]
    %v54 = vld [vmem:[#allocation2] sm:$0xff]
    %v55 = vld [vmem:[#allocation5] sm:$0xff]
    %v56 = vld [vmem:[#allocation5 + $0x8] sm:$0xff]
    %v57 = vld [vmem:[#allocation5 + $0x10] sm:$0xff]
    %v58 = vld [vmem:[#allocation5 + $0x18] sm:$0xff]
    %v59 = vld [vmem:[#allocation5 + $0x20] sm:$0xff]
    %v60 = vld [vmem:[#allocation5 + $0x28] sm:$0xff]
    %v61 = vld [vmem:[#allocation5 + $0x30] sm:$0xff]
    %v62 = vld [vmem:[#allocation5 + $0x38] sm:$0xff]
    %v63 = vld [vmem:[#allocation5 + $0x40] sm:$0xff]
    %v64 = vld [vmem:[#allocation5 + $0x48] sm:$0xff]
    %v65 = vld [vmem:[#allocation5 + $0x50] sm:$0xff]
    %v66 = vld [vmem:[#allocation5 + $0x58] sm:$0xff]
    %v67 = vld [vmem:[#allocation5 + $0x60] sm:$0xff]
    %v68 = vld [vmem:[#allocation5 + $0x68] sm:$0xff]
    %v69 = vld [vmem:[#allocation5 + $0x70] sm:$0xff]
    %v70 = vld [vmem:[#allocation5 + $0x78] sm:$0xff]
    %71 = vmatprep.subr.mxu0 0.0
    %72 = vmatpush1.msra.mxu0 %v55
    %73 = vmatprep.subr.mxu0 0.0
    %74 = vmatpush1.msra.mxu0 %v56
    %75 = vmatprep.subr.mxu0 0.0
    %76 = vmatpush1.msra.mxu0 %v57
    %77 = vmatprep.subr.mxu0 0.0
    %78 = vmatpush1.msra.mxu0 %v58
    %79 = vmatprep.subr.mxu0 0.0
    %80 = vmatpush1.msra.mxu0 %v59
    %81 = vmatprep.subr.mxu0 0.0
    %82 = vmatpush1.msra.mxu0 %v60
    %83 = vmatprep.subr.mxu0 0.0
    %84 = vmatpush1.msra.mxu0 %v61
    %85 = vmatprep.subr.mxu0 0.0
    %86 = vmatpush1.msra.mxu0 %v62
    %87 = vmatprep.subr.mxu0 0.0
    %88 = vmatpush1.msra.mxu0 %v63
    %89 = vmatprep.subr.mxu0 0.0
    %90 = vmatpush1.msra.mxu0 %v64
    %91 = vmatprep.subr.mxu0 0.0
    %92 = vmatpush1.msra.mxu0 %v65
    %93 = vmatprep.subr.mxu0 0.0
    %94 = vmatpush1.msra.mxu0 %v66
    %95 = vmatprep.subr.mxu0 0.0
    %96 = vmatpush1.msra.mxu0 %v67
    %97 = vmatprep.subr.mxu0 0.0
    %98 = vmatpush1.msra.mxu0 %v68
    %99 = vmatprep.subr.mxu0 0.0
    %100 = vmatpush1.msra.mxu0 %v69
    %101 = vmatprep.subr.mxu0 0.0
    %102 = vmatpush1.msra.mxu0 %v70
    %103 = vmatprep.subr.mxu0 0.0
    %104 = vmatpush1.msra.mxu0 0.0
    %105 = vmatprep.subr.mxu0 0.0
    %106 = vmatpush1.msra.mxu0 0.0
    %107 = vmatprep.subr.mxu0 0.0
    %108 = vmatpush1.msra.mxu0 0.0
    %109 = vmatprep.subr.mxu0 0.0
    %110 = vmatpush1.msra.mxu0 0.0
    %111 = vmatprep.subr.mxu0 0.0
    %112 = vmatpush1.msra.mxu0 0.0
    %113 = vmatprep.subr.mxu0 0.0
    %114 = vmatpush1.msra.mxu0 0.0
    %115 = vmatprep.subr.mxu0 0.0
    %116 = vmatpush1.msra.mxu0 0.0
    %117 = vmatprep.subr.mxu0 0.0
    %118 = vmatpush1.msra.mxu0 0.0
    %119 = vmatprep.subr.mxu0 0.0
    %120 = vmatpush1.msra.mxu0 0.0
    %121 = vmatprep.subr.mxu0 0.0
    %122 = vmatpush1.msra.mxu0 0.0
    %123 = vmatprep.subr.mxu0 0.0
    %124 = vmatpush1.msra.mxu0 0.0
    %125 = vmatprep.subr.mxu0 0.0
    %126 = vmatpush1.msra.mxu0 0.0
    %127 = vmatprep.subr.mxu0 0.0
    %128 = vmatpush1.msra.mxu0 0.0
    %129 = vmatprep.subr.mxu0 0.0
    %130 = vmatpush1.msra.mxu0 0.0
    %131 = vmatprep.subr.mxu0 0.0
    %132 = vmatpush1.msra.mxu0 0.0
    %133 = vmatprep.subr.mxu0 0.0
    %134 = vmatpush1.msra.mxu0 0.0
    %135 = vmatprep.mubr.f32.mxu0 0.0
    %136 = vmatmul.mubr.f32.gmra.mrb[0].mxu0 %v54
    %v137 = vpop.f32.mrb[0].mxu0
    %v138 = vadd.f32 0.0, %v137
    %v139 = vpop.f32.mrb[0].mxu0
    %140 = vdwg.mxu0
    %v141 = vadd.f32 %v53, %v138
    %142 = vst [vmem:[#allocation7] sm:$0xff] %v141
    // Predicated region
    $region26: #{tpu_custom_call.1} parent=1 // pred_check
      _
    $region27: #{tpu_custom_call.1} parent=1 // pred_check_branch
      %144 = sbr.rel (0) target = $region29
    $region28: #{tpu_custom_call.1} parent=1 // pred_region
      %s146 = ssub.s32 128, 128
      %147 = vsyncadd [#allocation4], %s146
      %s149 = sshll.u32 [#allocation7], 4
      %s150 = int_to_ptr.vmem [resolvable:$true] %s149
      %152 = dma.vmem_to_hbm [thread:$0]  %s150, 128, %s3, [#allocation4]
    $region29: #{tpu_custom_call.1} parent=1 // pred_fallthru
      _
    // Predicated region
    $region30: #{tpu_custom_call.1} parent=1 // pred_check
      _
    $region31: #{tpu_custom_call.1} parent=1 // pred_check_branch
      %154 = sbr.rel (0) target = $region33
    $region32: #{tpu_custom_call.1} parent=1 // pred_region
      %155 = dma.done [#allocation4], 128
    $region33: #{tpu_custom_call.1} parent=1 // pred_fallthru
      _
    %156 = vsyncpa [#allocation3], 1
    %157 = vsyncpa [#allocation6], 1
    %158 = vsyncpa [#allocation4], 1

</llo_original>
